<compile_context>
chip_gen: v7x
topology: tpu7x:2x2x1
jax: 0.10.0
libtpu: 0.0.40
codegen_flags: <defaults>
</compile_context>

<pallas_src>
import jax
import jax.numpy as jnp
from jax.experimental import pallas as pl
from jax.experimental.pallas import tpu as pltpu


_MXU_MIN_CIN = 128            # below this, MXU spin-up is not worth it
_TARGET_TILE_BYTES = 4 * 1024 * 1024   # ~4 MiB of x per (double-buffered) tile


def _vpu_kernel(c_out):
    """Reduction on VPU/XLU for small C_in (typical LPIPS heads)."""

    def kernel(w_ref, x_ref, o_ref):
        # w_ref: (C_in, C_out) tiny resident block
        # x_ref: (C_in, TM)    lane-dense spatial tile
        # o_ref: (C_out, TM)
        w = w_ref[...].astype(jnp.float32)       # hoisted once, out of the loop
        x = x_ref[...]
        for co in range(c_out):                  # c_out is tiny (typically 1)
            wc = w[:, co:co + 1]                 # (C_in, 1) f32
            # f32 promotion fused into the multiply/reduce -- no explicit
            # full-tile f32 copy of x is materialized.
            acc = jnp.sum(wc * x, axis=0, keepdims=True)   # (1, TM) f32
            o_ref[co:co + 1, :] = acc.astype(o_ref.dtype)

    return kernel


def _mxu_kernel(w_ref, x_ref, o_ref):
    """Reduction on the (otherwise idle) MXU for large C_in."""
    # w_ref: (C_out, C_in); x_ref: (C_in, TM); o_ref: (C_out, TM)
    acc = jax.lax.dot_general(
        w_ref[...], x_ref[...],
        dimension_numbers=(((1,), (0,)), ((), ())),
        precision=jax.lax.Precision.HIGHEST,
        preferred_element_type=jnp.float32,
    )
    o_ref[...] = acc.astype(o_ref.dtype)


def _pick_spatial_tile(m, n, c_in, itemsize):
    """Lane-dense spatial tile: multiple of 128 (ragged last block OK) or full m."""
    tm = (_TARGET_TILE_BYTES // max(c_in * itemsize, 1)) // 128 * 128
    tm = max(tm, 128)
    if n == 1 and m > 128:
        # v7x megacore: with a single batch, keep >= 2 parallel grid steps.
        half = (((m + 1) // 2) + 127) // 128 * 128
        tm = min(tm, half)
    if tm >= m:
        return m          # one full-extent block (always a legal block shape)
    return tm             # multiple of 128; Pallas masks the ragged last block


def net_lin_layer(x_nchw, weight_oi11):
    """1x1 conv, no bias.

    x_nchw:      (N, C_in, H, W)
    weight_oi11: (C_out, C_in, 1, 1)   -- PyTorch Conv2d weight layout
    returns:     (N, C_out, H, W)
    """
    n, c_in, h, w = x_nchw.shape
    c_out = weight_oi11.shape[0]
    m = h * w
    itemsize = jnp.dtype(x_nchw.dtype).itemsize

    # Contiguous reshapes only -- no HBM transpose passes.
    x_flat = x_nchw.reshape(n, c_in, m)                  # (N, C_in, M)
    w2d = weight_oi11.reshape(c_out, c_in)               # (C_out, C_in)

    use_mxu = c_in >= _MXU_MIN_CIN
    if use_mxu:
        kernel = _mxu_kernel
        w_arg = w2d                                      # (C_out, C_in)
    else:
        kernel = _vpu_kernel(c_out)
        w_arg = w2d.T                                    # (C_in, C_out)

    tm = _pick_spatial_tile(m, n, c_in, itemsize)
    grid = (n, pl.cdiv(m, tm))

    # Advisory cost estimate: purely memory-bound custom call.
    cost = pl.CostEstimate(
        flops=2 * n * c_in * c_out * m,
        transcendentals=0,
        bytes_accessed=(n * c_in * m + n * c_out * m) * itemsize
        + c_in * c_out * jnp.dtype(weight_oi11.dtype).itemsize,
    )

    out_flat = pl.pallas_call(
        kernel,
        out_shape=jax.ShapeDtypeStruct((n, c_out, m), x_nchw.dtype),
        grid=grid,
        in_specs=[
            # Tiny weight block, resident / identical for every grid step.
            pl.BlockSpec(w_arg.shape, lambda b, i: (0, 0)),
            # x tile: squeeze the batch dim, keep (C_in, TM) lane-dense.
            pl.BlockSpec((None, c_in, tm), lambda b, i: (b, 0, i)),
        ],
        out_specs=pl.BlockSpec((None, c_out, tm), lambda b, i: (b, 0, i)),
        compiler_params=pltpu.CompilerParams(
            dimension_semantics=("parallel", "parallel"),
            # Raise the scoped-VMEM limit (v5e default is only 16 MiB) while
            # staying safely under v7x's 64 MiB physical VMEM per TensorCore.
            vmem_limit_bytes=48 * 1024 * 1024,
        ),
        cost_estimate=cost,
    )(w_arg, x_flat)

    return out_flat.reshape(n, c_out, h, w)


if __name__ == "__main__":
    key = jax.random.PRNGKey(0)
    kx, kw = jax.random.split(key)

    N, C_IN, H, W = 2, 4, 16, 16
    C_OUT = 1

    x = jax.random.normal(kx, (N, C_IN, H, W), dtype=jnp.float32)
    # Conv2d weight shape: (C_out, C_in, 1, 1).
    weight = jax.random.normal(kw, (C_OUT, C_IN, 1, 1), dtype=jnp.float32) * 0.1

    out = jax.block_until_ready(net_lin_layer(x, weight))

    # Reference check in plain JAX.
    ref = jnp.einsum("nchw,oc->nohw", x, weight.reshape(C_OUT, C_IN))
    assert out.shape == (N, C_OUT, H, W)
    assert jnp.allclose(out, ref, atol=1e-5, rtol=1e-5)

    print("KERNEL_OK")
</pallas_src>

<mosaic_0001>
module attributes {stable_mosaic.version = 11 : i64} {
  func.func @kernel(%arg0: i32, %arg1: i32, %arg2: memref<4x1xf32, #tpu.memory_space<vmem>>, %arg3: memref<1x4x256xf32, #tpu.memory_space<vmem>>, %arg4: memref<1x1x256xf32, #tpu.memory_space<vmem>>) attributes {dimension_semantics = [#tpu.dimension_semantics<parallel>, #tpu.dimension_semantics<parallel>], iteration_bounds = array<i64: 2, 1>, scalar_prefetch = 0 : i64, scratch_operands = 0 : i64, tpu.core_type = #tpu.core_type<tc>, window_params = [{pipeline_mode = #tpu.pipeline_mode<synchronous>, transform_indices = @transform_0, window_bounds = array<i64: 4, 1>}, {transform_indices = @transform_1, window_bounds = array<i64: 1, 4, 256>}, {transform_indices = @transform_2, window_bounds = array<i64: 1, 1, 256>}]} {
    %c0 = arith.constant 0 : index
    %c0_0 = arith.constant 0 : index
    %0 = vector.load %arg2[%c0, %c0_0] : memref<4x1xf32, #tpu.memory_space<vmem>>, vector<4x1xf32>
    %c0_1 = arith.constant 0 : index
    %c0_2 = arith.constant 0 : index
    %c0_3 = arith.constant 0 : index
    %1 = vector.load %arg3[%c0_1, %c0_2, %c0_3] : memref<1x4x256xf32, #tpu.memory_space<vmem>>, vector<1x4x256xf32>
    %2 = vector.shape_cast %1 : vector<1x4x256xf32> to vector<4x256xf32>
    %3 = vector.broadcast %0 : vector<4x1xf32> to vector<4x256xf32>
    %4 = arith.mulf %3, %2 : vector<4x256xf32>
    %cst = arith.constant dense<0.000000e+00> : vector<256xf32>
    %5 = vector.multi_reduction <add>, %4, %cst [0] : vector<4x256xf32> to vector<256xf32>
    %6 = vector.shape_cast %5 : vector<256xf32> to vector<1x256xf32>
    %c0_4 = arith.constant 0 : index
    %c0_5 = arith.constant 0 : index
    %c0_6 = arith.constant 0 : index
    %7 = vector.load %arg4[%c0_4, %c0_5, %c0_6] : memref<1x1x256xf32, #tpu.memory_space<vmem>>, vector<1x1x256xf32>
    %8 = vector.shape_cast %7 : vector<1x1x256xf32> to vector<1x256xf32>
    %9 = vector.shape_cast %6 : vector<1x256xf32> to vector<1x1x256xf32>
    tpu.vector_store %arg4[%c0_4, %c0_5, %c0_6], %9 {strides = array<i32>} : memref<1x1x256xf32, #tpu.memory_space<vmem>>, vector<1x1x256xf32>,
    return
  }
  func.func @transform_0(%arg0: i32, %arg1: i32) -> (i32, i32) {
    %c0_i32 = arith.constant 0 : i32
    %c0_i32_0 = arith.constant 0 : i32
    %c0_i32_1 = arith.constant 0 : i32
    return %c0_i32, %c0_i32_0 : i32, i32
  }
  func.func @transform_1(%arg0: i32, %arg1: i32) -> (i32, i32, i32) {
    %c0_i32 = arith.constant 0 : i32
    %c0_i32_0 = arith.constant 0 : i32
    return %arg0, %c0_i32, %arg1 : i32, i32, i32
  }
  func.func @transform_2(%arg0: i32, %arg1: i32) -> (i32, i32, i32) {
    %c0_i32 = arith.constant 0 : i32
    %c0_i32_0 = arith.constant 0 : i32
    return %arg0, %c0_i32, %arg1 : i32, i32, i32
  }
}

</mosaic_0001>

<llo_original>
// kernel: tpu_custom_call.1
$region0: #{tpu_custom_call.1}
  #allocation0 [shape = 'u32[]', space=smem, size = 0x4, offset = 0x4, fixed_abs, tag = 'smem constant byte address 0x4 - core index']
  #allocation1 [shape = 'u32[144,128]{1,0:T(1,128)}', space=vmem, size = 0x12000, scoped, tag = 'internal scratch']
  %s0 = inlined_call_operand.vmem [shape: f32[4,1], index: 0, kind: input, shape index: {}]
  %s1 = inlined_call_operand.hbm [shape: f32[2,4,256], index: 1, kind: input, shape index: {}]
  %s2 = inlined_call_operand.hbm [shape: f32[2,1,256], index: 2, kind: output, shape index: {}]
  %s3 = sld [smem:[#allocation0]]
  $region45: #{tpu_custom_call.1} parent=0
    _
  %s5 = ssub.s32 1, %s3
  %s6 = scalar_select 0, %s5, %s3
  $region1: #{tpu_custom_call.1} parent=0
    #allocation2 [shape = 'u8[8192]{0}', space=vmem, size = 0x2000, scoped, tag = 'input window, operand 1']
    #allocation3 [shape = 's32[2]{0}', space=sflag, size = 0x8, scoped, tag = 'scoped memory for tpu_custom_call.1']
    #allocation4 [shape = 's32[2]{0}', space=sflag, size = 0x8, scoped, tag = 'scoped memory for tpu_custom_call.1']
    #allocation5 [shape = 'u8[2048]{0}', space=vmem, size = 0x800, scoped, tag = 'output window, operand 0']
    %7 = vsyncpa [#allocation3], 0
    %s8 = scalar_lea.sflag [#allocation3], 1
    %9 = vsyncpa %s8, 0
    %10 = vsyncpa [#allocation4], 0
    %s11 = scalar_lea.sflag [#allocation4], 1
    %12 = vsyncpa %s11, 0
    loop: start=0, step=1, limit=4
    $region2: #{tpu_custom_call.1} parent=1 // loop_pre_header
      _
    $region3: #{tpu_custom_call.1} parent=1 // loop_header
      %s14 = sphi 0, %s18
      %p15 = scmp.ge.s32.totalorder %s14, 4
      %s21 = sphi 0, %s33
      %s22 = sphi 0, %s29
      %s23 = sphi 0, %s21
      %s24 = sphi 0, %s22
      %s25 = sphi 0, %s23
      %s26 = sphi 0, %s24
      %s34 = sphi 0, %s34
      %s36 = sphi 0, %s34
      %s37 = sphi 0, %s36
      %s51 = sphi 0, %s37
      %s59 = sphi 0, %s61
      %s62 = sphi 0, %s59
      %s63 = sphi 0, %s62
      %s79 = sphi 0, %s63
      %s87 = sphi 0, %s89
      %s90 = sphi 0, %s87
      %s91 = sphi 0, %s90
      %s107 = sphi 0, %s91
    $region4: #{tpu_custom_call.1} parent=1 // loop_header_branch
      %17 = sbr.rel (%p15) target = $region8
    $region5: #{tpu_custom_call.1} parent=1 // loop_body
      %s19 = ssub.s32 %s14, 1
      %s20 = ssub.s32 %s14, 2
      %s27 = sadd.s32 1, %s22
      %p28 = scmp.ge.s32.totalorder %s27, 1
      %s29 = scalar_select %p28, 0, %s27
      %s30 = sadd.s32 1, %s21
      %s31 = scalar_select %p28, %s30, %s21
      %p32 = scmp.ge.s32.totalorder %s31, 2
      %s33 = scalar_select %p32, 0, %s31
      %s35 = sadd.s32 %s34, 1
      %p38 = scmp.eq.s32.totalorder %s14, 1
      %p39 = scmp.ne.s32.totalorder %s34, %s36
      %p40 = scmp.eq.s32.totalorder %s14, 0
      %p41 = por %p39, %p40
      %p42 = scmp.ne.s32.totalorder %s34, %s36
      %p43 = scmp.eq.s32.totalorder %s19, 1
      %p44 = por %p42, %p43
      %p45 = scmp.ne.s32.totalorder %s36, %s37
      %p46 = scmp.eq.s32.totalorder %s19, 0
      %p47 = por %p45, %p46
      %p48 = scmp.ne.s32.totalorder %s36, %s37
      %p49 = scmp.eq.s32.totalorder %s20, 1
      %p50 = por %p48, %p49
      %p52 = scmp.ne.s32.totalorder %s37, %s51
      %p53 = scmp.eq.s32.totalorder %s20, 0
      %p54 = por %p52, %p53
      %s55 = ssub.s32 %s21, %s33
      %s56 = ssub.s32 %s22, %s29
      %s57 = sor.u32 %s55, %s56
      %p58 = scmp.eq.s32.totalorder %s57, 0
      %s60 = sadd.s32 %s59, 1
      %s61 = scalar_select %p58, %s59, %s60
      %p64 = pneg %p58
      %p65 = scmp.eq.s32.totalorder %s14, 1
      %p66 = por %p64, %p65
      %p67 = scmp.ne.s32.totalorder %s59, %s62
      %p68 = scmp.eq.s32.totalorder %s14, 0
      %p69 = por %p67, %p68
      %p70 = scmp.ne.s32.totalorder %s59, %s62
      %p71 = scmp.eq.s32.totalorder %s19, 1
      %p72 = por %p70, %p71
      %p73 = scmp.ne.s32.totalorder %s62, %s63
      %p74 = scmp.eq.s32.totalorder %s19, 0
      %p75 = por %p73, %p74
      %p76 = scmp.ne.s32.totalorder %s62, %s63
      %p77 = scmp.eq.s32.totalorder %s20, 1
      %p78 = por %p76, %p77
      %p80 = scmp.ne.s32.totalorder %s63, %s79
      %p81 = scmp.eq.s32.totalorder %s20, 0
      %p82 = por %p80, %p81
      %s83 = ssub.s32 %s21, %s33
      %s84 = ssub.s32 %s22, %s29
      %s85 = sor.u32 %s83, %s84
      %p86 = scmp.eq.s32.totalorder %s85, 0
      %s88 = sadd.s32 %s87, 1
      %s89 = scalar_select %p86, %s87, %s88
      %p92 = pneg %p86
      %p93 = scmp.eq.s32.totalorder %s14, 1
      %p94 = por %p92, %p93
      %p95 = scmp.ne.s32.totalorder %s87, %s90
      %p96 = scmp.eq.s32.totalorder %s14, 0
      %p97 = por %p95, %p96
      %p98 = scmp.ne.s32.totalorder %s87, %s90
      %p99 = scmp.eq.s32.totalorder %s19, 1
      %p100 = por %p98, %p99
      %p101 = scmp.ne.s32.totalorder %s90, %s91
      %p102 = scmp.eq.s32.totalorder %s19, 0
      %p103 = por %p101, %p102
      %p104 = scmp.ne.s32.totalorder %s90, %s91
      %p105 = scmp.eq.s32.totalorder %s20, 1
      %p106 = por %p104, %p105
      %p108 = scmp.ne.s32.totalorder %s91, %s107
      %p109 = scmp.eq.s32.totalorder %s20, 0
      %p110 = por %p108, %p109
      %p111 = scmp.le.s32.totalorder 1, %s14
      %p112 = scmp.lt.s32.totalorder %s14, 3
      %p113 = pnand %p111, %p112
      %p114 = pneg %p113
      // Predicated region
      $region9: #{tpu_custom_call.1} parent=5 // pred_check
        _
      $region10: #{tpu_custom_call.1} parent=5 // pred_check_branch
        %116 = sbr.rel (%p113) target = $region12
      $region11: #{tpu_custom_call.1} parent=5 // pred_region
        %s117 = ssub.s32 %s14, 1
        // Predicated region
        $region13: #{tpu_custom_call.1} parent=11 // pred_check
          %p118 = pneg %p47
        $region14: #{tpu_custom_call.1} parent=11 // pred_check_branch
          %120 = sbr.rel (%p118) target = $region16
        $region15: #{tpu_custom_call.1} parent=11 // pred_region
          _
        $region16: #{tpu_custom_call.1} parent=11 // pred_fallthru
          _
      $region12: #{tpu_custom_call.1} parent=5 // pred_fallthru
        _
      %p121 = scmp.lt.s32.totalorder %s14, 2
      // Predicated region
      $region17: #{tpu_custom_call.1} parent=5 // pred_check
        %p122 = pneg %p121
      $region18: #{tpu_custom_call.1} parent=5 // pred_check_branch
        %124 = sbr.rel (%p122) target = $region20
      $region19: #{tpu_custom_call.1} parent=5 // pred_region
        // Predicated region
        $region21: #{tpu_custom_call.1} parent=19 // pred_check
          %p125 = pneg %p69
        $region22: #{tpu_custom_call.1} parent=19 // pred_check_branch
          %127 = sbr.rel (%p125) target = $region24
        $region23: #{tpu_custom_call.1} parent=19 // pred_region
          %s128 = sand.u32 %s59, 1
          %s129 = scalar_lea.sflag [#allocation3], %s128
          %s130 = sand.u32 %s59, 1
          %s131 = smul.addr %s130, 8
          %s132 = scalar_lea.vmem [#allocation2], %s131
          %s133 = smul.u32 2, %s22
          %s135 = ssub.s32 128, 128
          %136 = vsyncadd %s129, %s135
          %s137 = smul.addr %s21, 2
          %s138 = sadd.s32 %s133, %s137
          %s139 = smul.addr %s138, 64
          %s140 = scalar_lea.hbm %s1, %s139
          %s142 = sshll.u32 %s132, 4
          %s143 = int_to_ptr.vmem [resolvable:$true] %s142
          %145 = dma.hbm_to_vmem [thread:$0]  %s140, 128, %s143, %s129
        $region24: #{tpu_custom_call.1} parent=19 // pred_fallthru
          _
      $region20: #{tpu_custom_call.1} parent=5 // pred_fallthru
        _
      %p146 = scmp.le.s32.totalorder 1, %s14
      %p147 = scmp.lt.s32.totalorder %s14, 3
      %p148 = pnand %p146, %p147
      %p149 = pneg %p148
      // Predicated region
      $region25: #{tpu_custom_call.1} parent=5 // pred_check
        _
      $region26: #{tpu_custom_call.1} parent=5 // pred_check_branch
        %151 = sbr.rel (%p148) target = $region28
      $region27: #{tpu_custom_call.1} parent=5 // pred_region
        %s152 = ssub.s32 %s14, 1
        %s153 = sand.u32 %s62, 1
        %s154 = scalar_lea.sflag [#allocation3], %s153
        %s155 = sand.u32 %s62, 1
        %s156 = smul.addr %s155, 8
        %s157 = scalar_lea.vmem [#allocation2], %s156
        // Predicated region
        $region29: #{tpu_custom_call.1} parent=27 // pred_check
          %p158 = pneg %p75
        $region30: #{tpu_custom_call.1} parent=27 // pred_check_branch
          %160 = sbr.rel (%p158) target = $region32
        $region31: #{tpu_custom_call.1} parent=27 // pred_region
          %161 = dma.done %s154, 128
        $region32: #{tpu_custom_call.1} parent=27 // pred_fallthru
          _
        %p162 = pneg %p47
        %p163 = pneg %p44
        %s164 = sand.u32 %s62, 1
        %s165 = scalar_lea.sflag [#allocation3], %s164
        %s166 = sand.u32 %s62, 1
        %s167 = smul.addr %s166, 8
        %s168 = scalar_lea.vmem [#allocation2], %s167
        %p169 = pneg %p75
        %p170 = pneg %p72
        %p171 = pneg %p103
        %p172 = pneg %p100
        %s173 = sand.u32 %s90, 1
        %s174 = scalar_lea.sflag [#allocation4], %s173
        %s175 = sand.u32 %s90, 1
        %s176 = smul.addr %s175, 2
        %s177 = scalar_lea.vmem [#allocation5], %s176
        %s178 = smul.u32 2, %s24
        %s179 = smul.u32 2, %s24
        %v180 = vld [vmem:[%s0] sm:$0xf]
        %v181 = vld [vmem:[%s157] sm:$0xff]
        %183 = vset.pattern.permute.xlu0 0
        %184 = vperm.xlu0 %183, %v180
        %v185 = vpop.permute.xlu0 %184
        %v188 = vcombine.high %v181, %v181
        %v190 = vmul.f32 %v185, %v181
        %v191 = vmul.f32 %v185, %v188
        %vm192 = vcmask 1043456
        %v193 = vsel %vm192, %v190, 0.0
        %v194 = vrot.slane %v193, 4
        %v195 = vadd.f32 %v193, %v194
        %v196 = vrot.slane %v195, 2
        %v197 = vadd.f32 %v195, %v196
        %v198 = vrot.slane %v197, 1
        %v199 = vadd.f32 %v197, %v198
        %v200 = vsel %vm192, %v191, 0.0
        %v201 = vrot.slane %v200, 4
        %v202 = vadd.f32 %v200, %v201
        %v203 = vrot.slane %v202, 2
        %v204 = vadd.f32 %v202, %v203
        %v205 = vrot.slane %v204, 1
        %v206 = vadd.f32 %v204, %v205
        %v209 = vcombine.low %v199, %v206
        %v211 = vunpack.c.l.s4 1966171168
        %v212 = vunpack.c.0.s8 %v211
        %v213 = vlaneseq
        %v214 = vshrl.u32 %v213, 7
        %v215 = vsub.s32 %v212, %v214
        %v216 = vrot.slane %v209, %v215
        %v218 = vunpack.c.l.s4 1966171168
        %v219 = vunpack.c.0.s8 %v218
        %v220 = vlaneseq
        %v221 = vshrl.u32 %v220, 7
        %v222 = vsub.s32 %v219, %v221
        %v223 = vrot.slane %v216, %v222
        %v225 = vlaneseq
        %vm226 = vcmp.ge.s32.totalorder %v225, 0
        %vm227 = vcmp.lt.s32.totalorder %v225, 256
        %vm228 = vmand %vm226, %vm227
        %229 = vst.msk [vmem:[%s177] sm:$0x3] %vm228, %v223
        %s230 = sand.u32 %s90, 1
        %s231 = scalar_lea.sflag [#allocation4], %s230
        %s232 = sand.u32 %s90, 1
        %s233 = smul.addr %s232, 2
        %s234 = scalar_lea.vmem [#allocation5], %s233
        // Predicated region
        $region33: #{tpu_custom_call.1} parent=27 // pred_check
          %p235 = pneg %p100
        $region34: #{tpu_custom_call.1} parent=27 // pred_check_branch
          %237 = sbr.rel (%p235) target = $region36
        $region35: #{tpu_custom_call.1} parent=27 // pred_region
          %s238 = smul.u32 2, %s24
          %s240 = ssub.s32 32, 32
          %241 = vsyncadd %s231, %s240
          %s242 = smul.addr %s23, 2
          %s243 = sadd.s32 %s238, %s242
          %s244 = smul.addr %s243, 16
          %s245 = scalar_lea.hbm %s2, %s244
          %s247 = sshll.u32 %s234, 4
          %s248 = int_to_ptr.vmem [resolvable:$true] %s247
          %250 = dma.vmem_to_hbm [thread:$0]  %s248, 32, %s245, %s231
        $region36: #{tpu_custom_call.1} parent=27 // pred_fallthru
          _
      $region28: #{tpu_custom_call.1} parent=5 // pred_fallthru
        _
      %p251 = scmp.le.s32.totalorder 2, %s14
      // Predicated region
      $region37: #{tpu_custom_call.1} parent=5 // pred_check
        %p252 = pneg %p251
      $region38: #{tpu_custom_call.1} parent=5 // pred_check_branch
        %254 = sbr.rel (%p252) target = $region40
      $region39: #{tpu_custom_call.1} parent=5 // pred_region
        %s255 = ssub.s32 %s14, 2
        // Predicated region
        $region41: #{tpu_custom_call.1} parent=39 // pred_check
          %p256 = pneg %p106
        $region42: #{tpu_custom_call.1} parent=39 // pred_check_branch
          %258 = sbr.rel (%p256) target = $region44
        $region43: #{tpu_custom_call.1} parent=39 // pred_region
          %s259 = sand.u32 %s91, 1
          %s260 = scalar_lea.sflag [#allocation4], %s259
          %s261 = sand.u32 %s91, 1
          %s262 = smul.addr %s261, 2
          %s263 = scalar_lea.vmem [#allocation5], %s262
          %264 = dma.done %s260, 32
        $region44: #{tpu_custom_call.1} parent=39 // pred_fallthru
          _
      $region40: #{tpu_custom_call.1} parent=5 // pred_fallthru
        _
    $region6: #{tpu_custom_call.1} parent=1 // loop_footer
      %s18 = sadd.s32 1, %s14
    $region7: #{tpu_custom_call.1} parent=1 // loop_footer_branch
      %13 = sbr.rel target = $region3
    $region8: #{tpu_custom_call.1} parent=1 // loop_exit
      _
    %265 = vsyncpa [#allocation3], 1
    %s266 = scalar_lea.sflag [#allocation3], 1
    %267 = vsyncpa %s266, 1
    %268 = vsyncpa [#allocation4], 1
    %s269 = scalar_lea.sflag [#allocation4], 1
    %270 = vsyncpa %s269, 1

</llo_original>
